<compile_context>
chip_gen: v7x
topology: tpu7x:2x2x1
jax: 0.10.0
libtpu: 0.0.40
codegen_flags: <defaults>
</compile_context>

<pallas_src>
from functools import partial

import jax
import jax.numpy as jnp
from jax import lax
from jax.experimental import pallas as pl
from jax.experimental.pallas import tpu as pltpu


def _round_up(x: int, m: int) -> int:
    return ((x + m - 1) // m) * m


# --------------------------------------------------------------------------- #
# Kernel 1: fast adaptation                                                    #
#   support forward (teacher forcing) -> masked softmax-CE gradient ->         #
#   analytic backprop through the 2-layer head -> one SGD step.                #
#   Support sets are small, so this stays gridless / fully VMEM-resident.      #
# --------------------------------------------------------------------------- #
def adapt_kernel(f_sup_ref, tgt_ref, w1_ref, b1_ref, w2_ref, b2_ref,
                 w1a_ref, b1a_ref, w2a_ref, b2a_ref,
                 *, inner_lr: float, pad_idx: int, vocab_size: int):
    f = f_sup_ref[...]                                            # (Ns, Cp)
    w1 = w1_ref[...]
    b1 = b1_ref[...]
    w2 = w2_ref[...]
    b2 = b2_ref[...]

    # ---- support forward -------------------------------------------------- #
    z = jnp.dot(f, w1, preferred_element_type=jnp.float32) + b1   # (Ns, Dp)
    h = jnp.maximum(z, 0.0)
    logits = jnp.dot(h, w2, preferred_element_type=jnp.float32) + b2  # (Ns, Vp)

    Ns, Vp = logits.shape
    lane = lax.broadcasted_iota(jnp.int32, (Ns, Vp), 1)
    # kill padded vocab columns so they contribute 0 probability
    logits = jnp.where(lane < vocab_size, logits, jnp.float32(-1e30))

    tgt = tgt_ref[...]                                            # (Ns, 1) i32
    onehot = (lane == tgt).astype(jnp.float32)                    # (Ns, Vp)
    valid = (tgt != pad_idx).astype(jnp.float32)                  # (Ns, 1)
    n_valid = jnp.maximum(jnp.sum(valid), 1.0)

    # ---- masked softmax-CE gradient --------------------------------------- #
    m = jnp.max(logits, axis=-1, keepdims=True)
    e = jnp.exp(logits - m)
    inv_den = pl.reciprocal(jnp.sum(e, axis=-1, keepdims=True), approx=True)
    p = e * inv_den                                               # (Ns, Vp)
    dlogits = (p - onehot) * (valid * (1.0 / n_valid))            # (Ns, Vp)

    # ---- analytic backprop (transposed-operand dot_general, no XLU .T) ----- #
    dw2 = lax.dot_general(h, dlogits, (((0,), (0,)), ((), ())),
                          preferred_element_type=jnp.float32)     # (Dp, Vp)
    db2 = jnp.sum(dlogits, axis=0, keepdims=True)                 # (1, Vp)
    dh = lax.dot_general(dlogits, w2, (((1,), (1,)), ((), ())),
                         preferred_element_type=jnp.float32)      # (Ns, Dp)
    dz = dh * (z > 0.0).astype(jnp.float32)
    dw1 = lax.dot_general(f, dz, (((0,), (0,)), ((), ())),
                          preferred_element_type=jnp.float32)     # (Cp, Dp)
    db1 = jnp.sum(dz, axis=0, keepdims=True)                      # (1, Dp)

    # ---- inner-loop SGD step (learner.adapt) ------------------------------ #
    w1a_ref[...] = w1 - inner_lr * dw1
    b1a_ref[...] = b1 - inner_lr * db1
    w2a_ref[...] = w2 - inner_lr * dw2
    b2a_ref[...] = b2 - inner_lr * db2


# --------------------------------------------------------------------------- #
# Kernel 2: adapted inference forward, streamed over token tiles               #
# --------------------------------------------------------------------------- #
def infer_kernel(f_ref, w1_ref, b1_ref, w2_ref, b2_ref, logits_ref):
    z = jnp.dot(f_ref[...], w1_ref[...],
                preferred_element_type=jnp.float32) + b1_ref[...]
    h = jnp.maximum(z, 0.0)
    logits_ref[...] = (jnp.dot(h, w2_ref[...],
                               preferred_element_type=jnp.float32)
                       + b2_ref[...])


# --------------------------------------------------------------------------- #
# Wrapper: MAMLHTR.forward                                                     #
# --------------------------------------------------------------------------- #
def maml_htr_forward(adaptation_imgs, adaptation_targets, inference_imgs,
                     params, *, inner_lr: float = 1e-3, pad_idx: int = 0,
                     max_tile_n: int = 512):
    """
    adaptation_imgs   : (Bs, C, H, W) NCHW float32
    adaptation_targets: (Bs, W)       int32 (one target per time step / column)
    inference_imgs    : (Bi, C, H, W) NCHW float32
    params            : dict with w1 (C,D), b1 (1,D), w2 (D,V), b2 (1,V)
    Returns: logits (Bi, W, V) float32, sampled_ids (Bi, W) int32
    """
    w1, b1, w2, b2 = params["w1"], params["b1"], params["w2"], params["b2"]
    Bs, C, H, W = adaptation_imgs.shape
    Bi = inference_imgs.shape[0]
    D = w1.shape[1]
    V = w2.shape[1]

    # lane-dense padded dims
    Cp, Dp, Vp = _round_up(C, 128), _round_up(D, 128), _round_up(V, 128)
    Ns = Bs * W
    Ni = Bi * W
    Ns_p = _round_up(Ns, 8)
    tile_n = min(max_tile_n, _round_up(Ni, 8))
    Ni_p = _round_up(Ni, tile_n)

    # ---- column encoder (mean over H) done in XLA: (B,C,H,W) -> (B*W, C) ---- #
    f_sup = jnp.transpose(jnp.mean(adaptation_imgs, axis=2), (0, 2, 1)).reshape(Ns, C)
    f_inf = jnp.transpose(jnp.mean(inference_imgs, axis=2), (0, 2, 1)).reshape(Ni, C)

    # ---- pad everything to lane-dense shapes -------------------------------- #
    f_sup_p = jnp.zeros((Ns_p, Cp), jnp.float32).at[:Ns, :C].set(f_sup)
    f_inf_p = jnp.zeros((Ni_p, Cp), jnp.float32).at[:Ni, :C].set(f_inf)
    # padded support rows get pad_idx targets -> masked out of the loss
    tgt_p = jnp.full((Ns_p, 1), pad_idx, jnp.int32).at[:Ns, 0].set(
        adaptation_targets.reshape(-1).astype(jnp.int32))
    w1_p = jnp.zeros((Cp, Dp), jnp.float32).at[:C, :D].set(w1)
    b1_p = jnp.zeros((1, Dp), jnp.float32).at[:, :D].set(b1)
    w2_p = jnp.zeros((Dp, Vp), jnp.float32).at[:D, :V].set(w2)
    b2_p = jnp.zeros((1, Vp), jnp.float32).at[:, :V].set(b2)

    vmem = pl.BlockSpec(memory_space=pltpu.MemorySpace.VMEM)

    # ---- pass 1: inner-loop adaptation -> adapted weights ------------------- #
    # TODO(synk): for very large support sets this should become a reduction
    # grid accumulating dw/db across support tiles; support sets here are small.
    w1a, b1a, w2a, b2a = pl.pallas_call(
        partial(adapt_kernel, inner_lr=inner_lr, pad_idx=pad_idx, vocab_size=V),
        out_shape=(
            jax.ShapeDtypeStruct((Cp, Dp), jnp.float32),
            jax.ShapeDtypeStruct((1, Dp), jnp.float32),
            jax.ShapeDtypeStruct((Dp, Vp), jnp.float32),
            jax.ShapeDtypeStruct((1, Vp), jnp.float32),
        ),
        in_specs=[vmem] * 6,
        out_specs=(vmem, vmem, vmem, vmem),
    )(f_sup_p, tgt_p, w1_p, b1_p, w2_p, b2_p)

    # ---- pass 2: adapted inference forward, pipelined over token tiles ------ #
    grid = (Ni_p // tile_n,)
    logits_p = pl.pallas_call(
        infer_kernel,
        out_shape=jax.ShapeDtypeStruct((Ni_p, Vp), jnp.float32),
        grid_spec=pltpu.PrefetchScalarGridSpec(
            num_scalar_prefetch=0,
            grid=grid,
            in_specs=[
                pl.BlockSpec((tile_n, Cp), lambda i: (i, 0)),
                pl.BlockSpec((Cp, Dp), lambda i: (0, 0)),
                pl.BlockSpec((1, Dp), lambda i: (0, 0)),
                pl.BlockSpec((Dp, Vp), lambda i: (0, 0)),
                pl.BlockSpec((1, Vp), lambda i: (0, 0)),
            ],
            out_specs=pl.BlockSpec((tile_n, Vp), lambda i: (i, 0)),
        ),
        compiler_params=pltpu.CompilerParams(
            dimension_semantics=("parallel",)),
    )(f_inf_p, w1a, b1a, w2a, b2a)

    logits = logits_p[:Ni, :V].reshape(Bi, W, V)
    sampled_ids = jnp.argmax(logits, axis=-1).astype(jnp.int32)   # greedy decode
    return logits, sampled_ids


# --------------------------------------------------------------------------- #
# Pure-JAX reference (for verification)                                        #
# --------------------------------------------------------------------------- #
def _reference_forward(adaptation_imgs, adaptation_targets, inference_imgs,
                       params, *, inner_lr: float, pad_idx: int):
    w1, b1, w2, b2 = params["w1"], params["b1"], params["w2"], params["b2"]
    Bs, C, H, W = adaptation_imgs.shape
    Bi = inference_imgs.shape[0]
    V = w2.shape[1]

    f_sup = jnp.transpose(jnp.mean(adaptation_imgs, axis=2), (0, 2, 1)).reshape(Bs * W, C)
    tgt = adaptation_targets.reshape(-1)

    def support_loss(p):
        z = f_sup @ p["w1"] + p["b1"]
        h = jnp.maximum(z, 0.0)
        logits = h @ p["w2"] + p["b2"]
        logp = jax.nn.log_softmax(logits, axis=-1)
        ce = -jnp.take_along_axis(logp, tgt[:, None], axis=-1)[:, 0]
        mask = (tgt != pad_idx).astype(jnp.float32)
        return jnp.sum(ce * mask) / jnp.maximum(jnp.sum(mask), 1.0)

    grads = jax.grad(support_loss)(params)
    adapted = {k: params[k] - inner_lr * grads[k] for k in params}

    f_inf = jnp.transpose(jnp.mean(inference_imgs, axis=2), (0, 2, 1)).reshape(Bi * W, C)
    z = f_inf @ adapted["w1"] + adapted["b1"]
    h = jnp.maximum(z, 0.0)
    logits = h @ adapted["w2"] + adapted["b2"]
    return logits.reshape(Bi, W, V), jnp.argmax(logits, axis=-1).reshape(Bi, W)


if __name__ == "__main__":
    # small shapes: batch=2, channels=4, spatial=16x16, hidden=32, vocab=8
    B, C, H, W = 2, 4, 16, 16
    D, V = 32, 8
    PAD_IDX = 0
    INNER_LR = 1e-3

    key = jax.random.PRNGKey(0)
    k1, k2, k3, k4, k5 = jax.random.split(key, 5)

    adaptation_imgs = jax.random.normal(k1, (B, C, H, W), jnp.float32)
    inference_imgs = jax.random.normal(k2, (B, C, H, W), jnp.float32)
    adaptation_targets = jax.random.randint(k3, (B, W), 0, V).astype(jnp.int32)

    # deterministic synthetic base-model head parameters
    params = {
        "w1": jax.random.normal(k4, (C, D), jnp.float32) * 0.1,
        "b1": jnp.zeros((1, D), jnp.float32),
        "w2": jax.random.normal(k5, (D, V), jnp.float32) * 0.1,
        "b2": jnp.zeros((1, V), jnp.float32),
    }

    logits, sampled_ids = maml_htr_forward(
        adaptation_imgs, adaptation_targets, inference_imgs, params,
        inner_lr=INNER_LR, pad_idx=PAD_IDX)
    jax.block_until_ready((logits, sampled_ids))

    ref_logits, ref_ids = _reference_forward(
        adaptation_imgs, adaptation_targets, inference_imgs, params,
        inner_lr=INNER_LR, pad_idx=PAD_IDX)
    jax.block_until_ready((ref_logits, ref_ids))

    assert logits.shape == (B, W, V) and sampled_ids.shape == (B, W)
    assert jnp.allclose(logits, ref_logits, atol=1e-2, rtol=1e-2)

    # TODO(synk): the l2l MAML clone()/adapt() machinery over an arbitrary
    # base_model (CRNN/transformer HTR) has no direct Pallas equivalent; a
    # synthetic column-encoder + 2-layer head stands in, with the inner-loop
    # gradient derived analytically inside the adaptation kernel.
    print("KERNEL_OK")
</pallas_src>

<mosaic_0001>
module attributes {stable_mosaic.version = 11 : i64} {
  func.func @adapt_kernel(%arg0: memref<32x128xf32, #tpu.memory_space<vmem>>, %arg1: memref<32x1xi32, #tpu.memory_space<vmem>>, %arg2: memref<128x128xf32, #tpu.memory_space<vmem>>, %arg3: memref<1x128xf32, #tpu.memory_space<vmem>>, %arg4: memref<128x128xf32, #tpu.memory_space<vmem>>, %arg5: memref<1x128xf32, #tpu.memory_space<vmem>>, %arg6: memref<128x128xf32, #tpu.memory_space<vmem>>, %arg7: memref<1x128xf32, #tpu.memory_space<vmem>>, %arg8: memref<128x128xf32, #tpu.memory_space<vmem>>, %arg9: memref<1x128xf32, #tpu.memory_space<vmem>>) attributes {dimension_semantics = [], scalar_prefetch = 0 : i64, scratch_operands = 0 : i64, tpu.core_type = #tpu.core_type<tc>} {
    %c0 = arith.constant 0 : index
    %c0_0 = arith.constant 0 : index
    %0 = vector.load %arg0[%c0, %c0_0] : memref<32x128xf32, #tpu.memory_space<vmem>>, vector<32x128xf32>
    %c0_1 = arith.constant 0 : index
    %c0_2 = arith.constant 0 : index
    %1 = vector.load %arg2[%c0_1, %c0_2] : memref<128x128xf32, #tpu.memory_space<vmem>>, vector<128x128xf32>
    %c0_3 = arith.constant 0 : index
    %c0_4 = arith.constant 0 : index
    %2 = vector.load %arg3[%c0_3, %c0_4] : memref<1x128xf32, #tpu.memory_space<vmem>>, vector<1x128xf32>
    %c0_5 = arith.constant 0 : index
    %c0_6 = arith.constant 0 : index
    %3 = vector.load %arg4[%c0_5, %c0_6] : memref<128x128xf32, #tpu.memory_space<vmem>>, vector<128x128xf32>
    %c0_7 = arith.constant 0 : index
    %c0_8 = arith.constant 0 : index
    %4 = vector.load %arg5[%c0_7, %c0_8] : memref<1x128xf32, #tpu.memory_space<vmem>>, vector<1x128xf32>
    %cst = arith.constant dense<0.000000e+00> : vector<32x128xf32>
    %5 = tpu.matmul %0, %1, %cst {dimension_numbers = #tpu.dot_dimension_numbers<[1], [0], [0], [1], [0, 0, 1, 1], [], []>} : vector<32x128xf32>, vector<128x128xf32>, vector<32x128xf32> -> vector<32x128xf32>
    %6 = vector.broadcast %2 : vector<1x128xf32> to vector<32x128xf32>
    %7 = arith.addf %5, %6 : vector<32x128xf32>
    %cst_9 = arith.constant 0.000000e+00 : f32
    %8 = vector.broadcast %cst_9 : f32 to vector<32x128xf32>
    %9 = arith.maximumf %7, %8 : vector<32x128xf32>
    %cst_10 = arith.constant dense<0.000000e+00> : vector<32x128xf32>
    %10 = tpu.matmul %9, %3, %cst_10 {dimension_numbers = #tpu.dot_dimension_numbers<[1], [0], [0], [1], [0, 0, 1, 1], [], []>} : vector<32x128xf32>, vector<128x128xf32>, vector<32x128xf32> -> vector<32x128xf32>
    %11 = vector.broadcast %4 : vector<1x128xf32> to vector<32x128xf32>
    %12 = arith.addf %10, %11 : vector<32x128xf32>
    %13 = tpu.iota {dimensions = array<i32: 1>} : vector<32x128xi32>
    %c8_i32 = arith.constant 8 : i32
    %14 = vector.broadcast %c8_i32 : i32 to vector<32x128xi32>
    %15 = arith.cmpi slt, %13, %14 : vector<32x128xi32>
    %cst_11 = arith.constant -1.000000e+30 : f32
    %16 = vector.broadcast %cst_11 : f32 to vector<32x128xf32>
    %17 = arith.select %15, %12, %16 : vector<32x128xi1>, vector<32x128xf32>
    %c0_12 = arith.constant 0 : index
    %c0_13 = arith.constant 0 : index
    %18 = vector.load %arg1[%c0_12, %c0_13] : memref<32x1xi32, #tpu.memory_space<vmem>>, vector<32x1xi32>
    %19 = vector.broadcast %18 : vector<32x1xi32> to vector<32x128xi32>
    %20 = arith.cmpi eq, %13, %19 : vector<32x128xi32>
    %21 = arith.extui %20 : vector<32x128xi1> to vector<32x128xi32>
    %22 = arith.sitofp %21 : vector<32x128xi32> to vector<32x128xf32>
    %c0_i32 = arith.constant 0 : i32
    %23 = vector.broadcast %c0_i32 : i32 to vector<32x1xi32>
    %24 = arith.cmpi ne, %18, %23 : vector<32x1xi32>
    %25 = arith.extui %24 : vector<32x1xi1> to vector<32x1xi32>
    %26 = arith.sitofp %25 : vector<32x1xi32> to vector<32x1xf32>
    %27 = vector.shape_cast %26 : vector<32x1xf32> to vector<1x32x1xf32>
    %cst_14 = arith.constant dense<0.000000e+00> : vector<1xf32>
    %28 = vector.multi_reduction <add>, %27, %cst_14 [1, 2] : vector<1x32x1xf32> to vector<1xf32>
    %29 = vector.shape_cast %28 : vector<1xf32> to vector<1x1x1xf32>
    %30 = vector.extract %29[0, 0, 0] : f32 from vector<1x1x1xf32>
    %cst_15 = arith.constant 1.000000e+00 : f32
    %31 = arith.maximumf %30, %cst_15 : f32
    %cst_16 = arith.constant dense<0xFF800000> : vector<32xf32>
    %32 = vector.multi_reduction <maximumf>, %17, %cst_16 [1] : vector<32x128xf32> to vector<32xf32>
    %33 = vector.shape_cast %32 : vector<32xf32> to vector<32x1xf32>
    %34 = vector.broadcast %33 : vector<32x1xf32> to vector<32x128xf32>
    %35 = arith.subf %17, %34 : vector<32x128xf32>
    %36 = math.exp %35 : vector<32x128xf32>
    %cst_17 = arith.constant dense<0.000000e+00> : vector<32xf32>
    %37 = vector.multi_reduction <add>, %36, %cst_17 [1] : vector<32x128xf32> to vector<32xf32>
    %38 = vector.shape_cast %37 : vector<32xf32> to vector<32x1xf32>
    %39 = tpu.reciprocal %38 {approx = true} : vector<32x1xf32> -> vector<32x1xf32>
    %40 = vector.broadcast %39 : vector<32x1xf32> to vector<32x128xf32>
    %41 = arith.mulf %36, %40 : vector<32x128xf32>
    %42 = arith.subf %41, %22 : vector<32x128xf32>
    %cst_18 = arith.constant 1.000000e+00 : f32
    %43 = arith.divf %cst_18, %31 : f32
    %44 = vector.broadcast %43 : f32 to vector<32x1xf32>
    %45 = arith.mulf %26, %44 : vector<32x1xf32>
    %46 = vector.broadcast %45 : vector<32x1xf32> to vector<32x128xf32>
    %47 = arith.mulf %42, %46 : vector<32x128xf32>
    %cst_19 = arith.constant dense<0.000000e+00> : vector<128x128xf32>
    %48 = tpu.matmul %9, %47, %cst_19 {dimension_numbers = #tpu.dot_dimension_numbers<[0], [0], [1], [1], [0, 1, 1, 1], [], []>} : vector<32x128xf32>, vector<32x128xf32>, vector<128x128xf32> -> vector<128x128xf32>
    %cst_20 = arith.constant dense<0.000000e+00> : vector<128xf32>
    %49 = vector.multi_reduction <add>, %47, %cst_20 [0] : vector<32x128xf32> to vector<128xf32>
    %50 = vector.shape_cast %49 : vector<128xf32> to vector<1x128xf32>
    %cst_21 = arith.constant dense<0.000000e+00> : vector<32x128xf32>
    %51 = tpu.matmul %47, %3, %cst_21 {dimension_numbers = #tpu.dot_dimension_numbers<[1], [1], [0], [0], [0, 0, 1, 0], [], []>} : vector<32x128xf32>, vector<128x128xf32>, vector<32x128xf32> -> vector<32x128xf32>
    %cst_22 = arith.constant 0.000000e+00 : f32
    %52 = vector.broadcast %cst_22 : f32 to vector<32x128xf32>
    %53 = arith.cmpf ogt, %7, %52 : vector<32x128xf32>
    %54 = arith.extui %53 : vector<32x128xi1> to vector<32x128xi32>
    %55 = arith.sitofp %54 : vector<32x128xi32> to vector<32x128xf32>
    %56 = arith.mulf %51, %55 : vector<32x128xf32>
    %cst_23 = arith.constant dense<0.000000e+00> : vector<128x128xf32>
    %57 = tpu.matmul %0, %56, %cst_23 {dimension_numbers = #tpu.dot_dimension_numbers<[0], [0], [1], [1], [0, 1, 1, 1], [], []>} : vector<32x128xf32>, vector<32x128xf32>, vector<128x128xf32> -> vector<128x128xf32>
    %cst_24 = arith.constant dense<0.000000e+00> : vector<128xf32>
    %58 = vector.multi_reduction <add>, %56, %cst_24 [0] : vector<32x128xf32> to vector<128xf32>
    %59 = vector.shape_cast %58 : vector<128xf32> to vector<1x128xf32>
    %cst_25 = arith.constant 1.000000e-03 : f32
    %60 = vector.broadcast %cst_25 : f32 to vector<128x128xf32>
    %61 = arith.mulf %60, %57 : vector<128x128xf32>
    %62 = arith.subf %1, %61 : vector<128x128xf32>
    %c0_26 = arith.constant 0 : index
    %c0_27 = arith.constant 0 : index
    %63 = vector.load %arg6[%c0_26, %c0_27] : memref<128x128xf32, #tpu.memory_space<vmem>>, vector<128x128xf32>
    tpu.vector_store %arg6[%c0_26, %c0_27], %62 {strides = array<i32>} : memref<128x128xf32, #tpu.memory_space<vmem>>, vector<128x128xf32>,
    %cst_28 = arith.constant 1.000000e-03 : f32
    %64 = vector.broadcast %cst_28 : f32 to vector<1x128xf32>
    %65 = arith.mulf %64, %59 : vector<1x128xf32>
    %66 = arith.subf %2, %65 : vector<1x128xf32>
    %c0_29 = arith.constant 0 : index
    %c0_30 = arith.constant 0 : index
    %67 = vector.load %arg7[%c0_29, %c0_30] : memref<1x128xf32, #tpu.memory_space<vmem>>, vector<1x128xf32>
    tpu.vector_store %arg7[%c0_29, %c0_30], %66 {strides = array<i32>} : memref<1x128xf32, #tpu.memory_space<vmem>>, vector<1x128xf32>,
    %cst_31 = arith.constant 1.000000e-03 : f32
    %68 = vector.broadcast %cst_31 : f32 to vector<128x128xf32>
    %69 = arith.mulf %68, %48 : vector<128x128xf32>
    %70 = arith.subf %3, %69 : vector<128x128xf32>
    %c0_32 = arith.constant 0 : index
    %c0_33 = arith.constant 0 : index
    %71 = vector.load %arg8[%c0_32, %c0_33] : memref<128x128xf32, #tpu.memory_space<vmem>>, vector<128x128xf32>
    tpu.vector_store %arg8[%c0_32, %c0_33], %70 {strides = array<i32>} : memref<128x128xf32, #tpu.memory_space<vmem>>, vector<128x128xf32>,
    %cst_34 = arith.constant 1.000000e-03 : f32
    %72 = vector.broadcast %cst_34 : f32 to vector<1x128xf32>
    %73 = arith.mulf %72, %50 : vector<1x128xf32>
    %74 = arith.subf %4, %73 : vector<1x128xf32>
    %c0_35 = arith.constant 0 : index
    %c0_36 = arith.constant 0 : index
    %75 = vector.load %arg9[%c0_35, %c0_36] : memref<1x128xf32, #tpu.memory_space<vmem>>, vector<1x128xf32>
    tpu.vector_store %arg9[%c0_35, %c0_36], %74 {strides = array<i32>} : memref<1x128xf32, #tpu.memory_space<vmem>>, vector<1x128xf32>,
    return
  }
}

</mosaic_0001>

<llo_original>
// kernel: tpu_custom_call.1
$region0: #{tpu_custom_call.1}
  #allocation0 [shape = 'u32[]', space=smem, size = 0x4, offset = 0x4, fixed_abs, tag = 'smem constant byte address 0x4 - core index']
  #allocation1 [shape = 'u32[144,128]{1,0:T(1,128)}', space=vmem, size = 0x12000, scoped, tag = 'internal scratch']
  %s0 = inlined_call_operand.vmem [shape: f32[32,128], index: 0, kind: input, shape index: {}]
  %s1 = inlined_call_operand.vmem [shape: s32[32,1], index: 1, kind: input, shape index: {}]
  %s2 = inlined_call_operand.hbm [shape: f32[128,128], index: 2, kind: input, shape index: {}]
  %s3 = inlined_call_operand.vmem [shape: f32[1,128], index: 3, kind: input, shape index: {}]
  %s4 = inlined_call_operand.hbm [shape: f32[128,128], index: 4, kind: input, shape index: {}]
  %s5 = inlined_call_operand.vmem [shape: f32[1,128], index: 5, kind: input, shape index: {}]
  %s6 = inlined_call_operand.hbm [shape: f32[128,128], index: 6, kind: output, shape index: {0}]
  %s7 = inlined_call_operand.hbm [shape: f32[1,128], index: 7, kind: output, shape index: {1}]
  %s8 = inlined_call_operand.hbm [shape: f32[128,128], index: 8, kind: output, shape index: {2}]
  %s9 = inlined_call_operand.hbm [shape: f32[1,128], index: 9, kind: output, shape index: {3}]
  %10 = xla_tuple %s6, %s7, %s8, %s9
  %s11 = sld [smem:[#allocation0]]
  $region66: #{tpu_custom_call.1} parent=0
    _
  %s13 = ssub.s32 1, %s11
  %s14 = scalar_select 0, %s13, %s11
  $region1: #{tpu_custom_call.1} parent=0
    #allocation2 [shape = 'u8[65536]{0}', space=vmem, size = 0x10000, scoped, tag = 'input window, operand 2, single buffered']
    #allocation3 [shape = 's32[1]{0}', space=sflag, size = 0x4, scoped, tag = 'scoped memory for tpu_custom_call.1']
    #allocation4 [shape = 's32[1]{0}', space=sflag, size = 0x4, scoped, tag = 'scoped memory for tpu_custom_call.1']
    #allocation5 [shape = 'u8[65536]{0}', space=vmem, size = 0x10000, scoped, tag = 'input window, operand 4, single buffered']
    #allocation6 [shape = 's32[1]{0}', space=sflag, size = 0x4, scoped, tag = 'scoped memory for tpu_custom_call.1']
    #allocation7 [shape = 'u8[65536]{0}', space=vmem, size = 0x10000, scoped, tag = 'output window, operand 0, single buffered']
    #allocation8 [shape = 'u8[512]{0}', space=vmem, size = 0x400, scoped, tag = 'output window, operand 1, single buffered']
    #allocation9 [shape = 's32[1]{0}', space=sflag, size = 0x4, scoped, tag = 'scoped memory for tpu_custom_call.1']
    #allocation10 [shape = 'u8[65536]{0}', space=vmem, size = 0x10000, scoped, tag = 'output window, operand 2, single buffered']
    #allocation11 [shape = 'u8[512]{0}', space=vmem, size = 0x400, scoped, tag = 'output window, operand 3, single buffered']
    #allocation12 [shape = 's32[1]{0}', space=sflag, size = 0x4, scoped, tag = 'scoped memory for tpu_custom_call.1']
    %15 = vsyncpa [#allocation3], 0
    %16 = vsyncpa [#allocation6], 0
    %17 = vsyncpa [#allocation4], 0
    %18 = vsyncpa [#allocation9], 0
    %19 = vsyncpa [#allocation12], 0
    // Predicated region
    $region2: #{tpu_custom_call.1} parent=1 // pred_check
      _
    $region3: #{tpu_custom_call.1} parent=1 // pred_check_branch
      %21 = sbr.rel (0) target = $region5
    $region4: #{tpu_custom_call.1} parent=1 // pred_region
      _
    $region5: #{tpu_custom_call.1} parent=1 // pred_fallthru
      _
    // Predicated region
    $region6: #{tpu_custom_call.1} parent=1 // pred_check
      _
    $region7: #{tpu_custom_call.1} parent=1 // pred_check_branch
      %23 = sbr.rel (0) target = $region9
    $region8: #{tpu_custom_call.1} parent=1 // pred_region
      _
    $region9: #{tpu_custom_call.1} parent=1 // pred_fallthru
      _
    // Predicated region
    $region10: #{tpu_custom_call.1} parent=1 // pred_check
      _
    $region11: #{tpu_custom_call.1} parent=1 // pred_check_branch
      %25 = sbr.rel (0) target = $region13
    $region12: #{tpu_custom_call.1} parent=1 // pred_region
      %s27 = ssub.s32 2048, 2048
      %28 = vsyncadd [#allocation3], %s27
      %s29 = sshll.u32 [#allocation2], 4
      %s30 = int_to_ptr.vmem [resolvable:$true] %s29
      %35 = dma.hbm_to_vmem [thread:$0]  %s2, 2048, %s30, [#allocation3], 128, 128, 8
    $region13: #{tpu_custom_call.1} parent=1 // pred_fallthru
      _
    // Predicated region
    $region14: #{tpu_custom_call.1} parent=1 // pred_check
      _
    $region15: #{tpu_custom_call.1} parent=1 // pred_check_branch
      %37 = sbr.rel (0) target = $region17
    $region16: #{tpu_custom_call.1} parent=1 // pred_region
      _
    $region17: #{tpu_custom_call.1} parent=1 // pred_fallthru
      _
    // Predicated region
    $region18: #{tpu_custom_call.1} parent=1 // pred_check
      _
    $region19: #{tpu_custom_call.1} parent=1 // pred_check_branch
      %39 = sbr.rel (0) target = $region21
    $region20: #{tpu_custom_call.1} parent=1 // pred_region
      %s41 = ssub.s32 2048, 2048
      %42 = vsyncadd [#allocation6], %s41
      %s43 = sshll.u32 [#allocation5], 4
      %s44 = int_to_ptr.vmem [resolvable:$true] %s43
      %49 = dma.hbm_to_vmem [thread:$0]  %s4, 2048, %s44, [#allocation6], 128, 128, 8
    $region21: #{tpu_custom_call.1} parent=1 // pred_fallthru
      _
    // Predicated region
    $region22: #{tpu_custom_call.1} parent=1 // pred_check
      _
    $region23: #{tpu_custom_call.1} parent=1 // pred_check_branch
      %51 = sbr.rel (0) target = $region25
    $region24: #{tpu_custom_call.1} parent=1 // pred_region
      _
    $region25: #{tpu_custom_call.1} parent=1 // pred_fallthru
      _
    // Predicated region
    $region26: #{tpu_custom_call.1} parent=1 // pred_check
      _
    $region27: #{tpu_custom_call.1} parent=1 // pred_check_branch
      %53 = sbr.rel (0) target = $region29
    $region28: #{tpu_custom_call.1} parent=1 // pred_region
      %54 = dma.done [#allocation3], 2048
    $region29: #{tpu_custom_call.1} parent=1 // pred_fallthru
      _
    // Predicated region
    $region30: #{tpu_custom_call.1} parent=1 // pred_check
      _
    $region31: #{tpu_custom_call.1} parent=1 // pred_check_branch
      %56 = sbr.rel (0) target = $region33
    $region32: #{tpu_custom_call.1} parent=1 // pred_region
      %57 = dma.done [#allocation6], 2048
    $region33: #{tpu_custom_call.1} parent=1 // pred_fallthru
      _
    %v58 = vld [vmem:[%s0] sm:$0xff]
    %v59 = vld [vmem:[%s0 + $0x8] sm:$0xff]
    %v60 = vld [vmem:[%s0 + $0x10] sm:$0xff]
    %v61 = vld [vmem:[%s0 + $0x18] sm:$0xff]
    %v62 = vld [vmem:[#allocation2] sm:$0xff]
    %v63 = vld [vmem:[#allocation2 + $0x8] sm:$0xff]
    %v64 = vld [vmem:[#allocation2 + $0x10] sm:$0xff]
    %v65 = vld [vmem:[#allocation2 + $0x18] sm:$0xff]
    %v66 = vld [vmem:[#allocation2 + $0x20] sm:$0xff]
    %v67 = vld [vmem:[#allocation2 + $0x28] sm:$0xff]
    %v68 = vld [vmem:[#allocation2 + $0x30] sm:$0xff]
    %v69 = vld [vmem:[#allocation2 + $0x38] sm:$0xff]
    %v70 = vld [vmem:[#allocation2 + $0x40] sm:$0xff]
    %v71 = vld [vmem:[#allocation2 + $0x48] sm:$0xff]
    %v72 = vld [vmem:[#allocation2 + $0x50] sm:$0xff]
    %v73 = vld [vmem:[#allocation2 + $0x58] sm:$0xff]
    %v74 = vld [vmem:[#allocation2 + $0x60] sm:$0xff]
    %v75 = vld [vmem:[#allocation2 + $0x68] sm:$0xff]
    %v76 = vld [vmem:[#allocation2 + $0x70] sm:$0xff]
    %v77 = vld [vmem:[#allocation2 + $0x78] sm:$0xff]
    %v78 = vld [vmem:[%s3] sm:$0x1]
    %v79 = vld [vmem:[#allocation5] sm:$0xff]
    %v80 = vld [vmem:[#allocation5 + $0x8] sm:$0xff]
    %v81 = vld [vmem:[#allocation5 + $0x10] sm:$0xff]
    %v82 = vld [vmem:[#allocation5 + $0x18] sm:$0xff]
    %v83 = vld [vmem:[#allocation5 + $0x20] sm:$0xff]
    %v84 = vld [vmem:[#allocation5 + $0x28] sm:$0xff]
    %v85 = vld [vmem:[#allocation5 + $0x30] sm:$0xff]
    %v86 = vld [vmem:[#allocation5 + $0x38] sm:$0xff]
    %v87 = vld [vmem:[#allocation5 + $0x40] sm:$0xff]
    %v88 = vld [vmem:[#allocation5 + $0x48] sm:$0xff]
    %v89 = vld [vmem:[#allocation5 + $0x50] sm:$0xff]
    %v90 = vld [vmem:[#allocation5 + $0x58] sm:$0xff]
    %v91 = vld [vmem:[#allocation5 + $0x60] sm:$0xff]
    %v92 = vld [vmem:[#allocation5 + $0x68] sm:$0xff]
    %v93 = vld [vmem:[#allocation5 + $0x70] sm:$0xff]
    %v94 = vld [vmem:[#allocation5 + $0x78] sm:$0xff]
    %v95 = vld [vmem:[%s5] sm:$0x1]
    %v97 = vlaneseq
    %v98 = vshrl.u32 %v97, 7
    %v99 = vsub.s32 0, %v98
    %v100 = vrot.slane %v78, %v99
    %102 = vmatprep.subr.mxu0 0.0
    %103 = vmatpush1.msra.mxu0 %v62
    %104 = vmatprep.subr.mxu0 0.0
    %105 = vmatpush1.msra.mxu0 %v63
    %106 = vmatprep.subr.mxu0 0.0
    %107 = vmatpush1.msra.mxu0 %v64
    %108 = vmatprep.subr.mxu0 0.0
    %109 = vmatpush1.msra.mxu0 %v65
    %110 = vmatprep.subr.mxu0 0.0
    %111 = vmatpush1.msra.mxu0 %v66
    %112 = vmatprep.subr.mxu0 0.0
    %113 = vmatpush1.msra.mxu0 %v67
    %114 = vmatprep.subr.mxu0 0.0
    %115 = vmatpush1.msra.mxu0 %v68
    %116 = vmatprep.subr.mxu0 0.0
    %117 = vmatpush1.msra.mxu0 %v69
    %118 = vmatprep.subr.mxu0 0.0
    %119 = vmatpush1.msra.mxu0 %v70
    %120 = vmatprep.subr.mxu0 0.0
    %121 = vmatpush1.msra.mxu0 %v71
    %122 = vmatprep.subr.mxu0 0.0
    %123 = vmatpush1.msra.mxu0 %v72
    %124 = vmatprep.subr.mxu0 0.0
    %125 = vmatpush1.msra.mxu0 %v73
    %126 = vmatprep.subr.mxu0 0.0
    %127 = vmatpush1.msra.mxu0 %v74
    %128 = vmatprep.subr.mxu0 0.0
    %129 = vmatpush1.msra.mxu0 %v75
    %130 = vmatprep.subr.mxu0 0.0
    %131 = vmatpush1.msra.mxu0 %v76
    %132 = vmatprep.subr.mxu0 0.0
    %133 = vmatpush1.msra.mxu0 %v77
    %134 = vmatprep.subr.mxu0 0.0
    %135 = vmatpush1.msra.mxu0 0.0
    %136 = vmatprep.subr.mxu0 0.0
    %137 = vmatpush1.msra.mxu0 0.0
    %138 = vmatprep.subr.mxu0 0.0
    %139 = vmatpush1.msra.mxu0 0.0
    %140 = vmatprep.subr.mxu0 0.0
    %141 = vmatpush1.msra.mxu0 0.0
    %142 = vmatprep.subr.mxu0 0.0
    %143 = vmatpush1.msra.mxu0 0.0
    %144 = vmatprep.subr.mxu0 0.0
    %145 = vmatpush1.msra.mxu0 0.0
    %146 = vmatprep.subr.mxu0 0.0
    %147 = vmatpush1.msra.mxu0 0.0
    %148 = vmatprep.subr.mxu0 0.0
    %149 = vmatpush1.msra.mxu0 0.0
    %150 = vmatprep.subr.mxu0 0.0
    %151 = vmatpush1.msra.mxu0 0.0
    %152 = vmatprep.subr.mxu0 0.0
    %153 = vmatpush1.msra.mxu0 0.0
    %154 = vmatprep.subr.mxu0 0.0
    %155 = vmatpush1.msra.mxu0 0.0
    %156 = vmatprep.subr.mxu0 0.0
    %157 = vmatpush1.msra.mxu0 0.0
    %158 = vmatprep.subr.mxu0 0.0
    %159 = vmatpush1.msra.mxu0 0.0
    %160 = vmatprep.subr.mxu0 0.0
    %161 = vmatpush1.msra.mxu0 0.0
    %162 = vmatprep.subr.mxu0 0.0
    %163 = vmatpush1.msra.mxu0 0.0
    %164 = vmatprep.subr.mxu0 0.0
    %165 = vmatpush1.msra.mxu0 0.0
    %166 = vmatprep.mubr.f32.mxu0 0.0
    %167 = vmatmul.mubr.f32.gmra.mrb[0].mxu0 %v58
    %v168 = vpop.f32.mrb[0].mxu0
    %v169 = vadd.f32 %v100, %v168
    %v170 = vpop.f32.mrb[0].mxu0
    %171 = vmatprep.mubr.f32.mxu0 0.0
    %172 = vmatmul.mubr.f32.gmra.mrb[0].mxu0 %v59
    %v173 = vpop.f32.mrb[0].mxu0
    %v174 = vadd.f32 %v100, %v173
    %v175 = vpop.f32.mrb[0].mxu0
    %176 = vmatprep.mubr.f32.mxu0 0.0
    %177 = vmatmul.mubr.f32.gmra.mrb[0].mxu0 %v60
    %v178 = vpop.f32.mrb[0].mxu0
    %v179 = vadd.f32 %v100, %v178
    %v180 = vpop.f32.mrb[0].mxu0
    %181 = vmatprep.mubr.f32.mxu0 0.0
    %182 = vmatmul.mubr.f32.gmra.mrb[0].mxu0 %v61
    %v183 = vpop.f32.mrb[0].mxu0
    %v184 = vadd.f32 %v100, %v183
    %v185 = vpop.f32.mrb[0].mxu0
    %186 = vdwg.mxu0
    %v187 = vmax.f32 %v169, 0.0
    %v188 = vmax.f32 %v174, 0.0
    %v189 = vmax.f32 %v179, 0.0
    %v190 = vmax.f32 %v184, 0.0
    %v192 = vlaneseq
    %v193 = vshrl.u32 %v192, 7
    %v194 = vsub.s32 0, %v193
    %v195 = vrot.slane %v95, %v194
    %197 = vmatprep.subr.mxu0 0.0
    %198 = vmatpush1.msra.mxu0 %v79
    %199 = vmatprep.subr.mxu0 0.0
    %200 = vmatpush1.msra.mxu0 %v80
    %201 = vmatprep.subr.mxu0 0.0
    %202 = vmatpush1.msra.mxu0 %v81
    %203 = vmatprep.subr.mxu0 0.0
    %204 = vmatpush1.msra.mxu0 %v82
    %205 = vmatprep.subr.mxu0 0.0
    %206 = vmatpush1.msra.mxu0 %v83
    %207 = vmatprep.subr.mxu0 0.0
    %208 = vmatpush1.msra.mxu0 %v84
    %209 = vmatprep.subr.mxu0 0.0
    %210 = vmatpush1.msra.mxu0 %v85
    %211 = vmatprep.subr.mxu0 0.0
    %212 = vmatpush1.msra.mxu0 %v86
    %213 = vmatprep.subr.mxu0 0.0
    %214 = vmatpush1.msra.mxu0 %v87
    %215 = vmatprep.subr.mxu0 0.0
    %216 = vmatpush1.msra.mxu0 %v88
    %217 = vmatprep.subr.mxu0 0.0
    %218 = vmatpush1.msra.mxu0 %v89
    %219 = vmatprep.subr.mxu0 0.0
    %220 = vmatpush1.msra.mxu0 %v90
    %221 = vmatprep.subr.mxu0 0.0
    %222 = vmatpush1.msra.mxu0 %v91
    %223 = vmatprep.subr.mxu0 0.0
    %224 = vmatpush1.msra.mxu0 %v92
    %225 = vmatprep.subr.mxu0 0.0
    %226 = vmatpush1.msra.mxu0 %v93
    %227 = vmatprep.subr.mxu0 0.0
    %228 = vmatpush1.msra.mxu0 %v94
    %229 = vmatprep.subr.mxu0 0.0
    %230 = vmatpush1.msra.mxu0 0.0
    %231 = vmatprep.subr.mxu0 0.0
    %232 = vmatpush1.msra.mxu0 0.0
    %233 = vmatprep.subr.mxu0 0.0
    %234 = vmatpush1.msra.mxu0 0.0
    %235 = vmatprep.subr.mxu0 0.0
    %236 = vmatpush1.msra.mxu0 0.0
    %237 = vmatprep.subr.mxu0 0.0
    %238 = vmatpush1.msra.mxu0 0.0
    %239 = vmatprep.subr.mxu0 0.0
    %240 = vmatpush1.msra.mxu0 0.0
    %241 = vmatprep.subr.mxu0 0.0
    %242 = vmatpush1.msra.mxu0 0.0
    %243 = vmatprep.subr.mxu0 0.0
    %244 = vmatpush1.msra.mxu0 0.0
    %245 = vmatprep.subr.mxu0 0.0
    %246 = vmatpush1.msra.mxu0 0.0
    %247 = vmatprep.subr.mxu0 0.0
    %248 = vmatpush1.msra.mxu0 0.0
    %249 = vmatprep.subr.mxu0 0.0
    %250 = vmatpush1.msra.mxu0 0.0
    %251 = vmatprep.subr.mxu0 0.0
    %252 = vmatpush1.msra.mxu0 0.0
    %253 = vmatprep.subr.mxu0 0.0
    %254 = vmatpush1.msra.mxu0 0.0
    %255 = vmatprep.subr.mxu0 0.0
    %256 = vmatpush1.msra.mxu0 0.0
    %257 = vmatprep.subr.mxu0 0.0
    %258 = vmatpush1.msra.mxu0 0.0
    %259 = vmatprep.subr.mxu0 0.0
    %260 = vmatpush1.msra.mxu0 0.0
    %261 = vmatprep.mubr.f32.mxu0 0.0
    %262 = vmatmul.mubr.f32.gmra.mrb[0].mxu0 %v187
    %v263 = vpop.f32.mrb[0].mxu0
    %v264 = vadd.f32 %v195, %v263
    %v265 = vpop.f32.mrb[0].mxu0
    %266 = vmatprep.mubr.f32.mxu0 0.0
    %267 = vmatmul.mubr.f32.gmra.mrb[0].mxu0 %v188
    %v268 = vpop.f32.mrb[0].mxu0
    %v269 = vadd.f32 %v195, %v268
    %v270 = vpop.f32.mrb[0].mxu0
    %271 = vmatprep.mubr.f32.mxu0 0.0
    %272 = vmatmul.mubr.f32.gmra.mrb[0].mxu0 %v189
    %v273 = vpop.f32.mrb[0].mxu0
    %v274 = vadd.f32 %v195, %v273
    %v275 = vpop.f32.mrb[0].mxu0
    %276 = vmatprep.mubr.f32.mxu0 0.0
    %277 = vmatmul.mubr.f32.gmra.mrb[0].mxu0 %v190
    %v278 = vpop.f32.mrb[0].mxu0
    %v279 = vadd.f32 %v195, %v278
    %v280 = vpop.f32.mrb[0].mxu0
    %281 = vdwg.mxu0
    %v282 = vlaneseq
    %v283 = vand.u32 %v282, 127
    %vm284 = vcmp.lt.s32.totalorder %v283, 8
    %v285 = vsel %vm284, %v264, -1e+30
    %v286 = vsel %vm284, %v269, -1e+30
    %v287 = vsel %vm284, %v274, -1e+30
    %v288 = vsel %vm284, %v279, -1e+30
    %v289 = vld [vmem:[%s1] sm:$0xff]
    %v290 = vld [vmem:[%s1 + $0x8] sm:$0xff]
    %v291 = vld [vmem:[%s1 + $0x10] sm:$0xff]
    %v292 = vld [vmem:[%s1 + $0x18] sm:$0xff]
    %293 = vset.pattern.permute.xlu0 0
    %294 = vperm.xlu0 %293, %v289
    %v295 = vpop.permute.xlu0 %294
    %296 = vset.pattern.permute.xlu0 0
    %297 = vperm.xlu0 %296, %v290
    %v298 = vpop.permute.xlu0 %297
    %299 = vset.pattern.permute.xlu0 0
    %300 = vperm.xlu0 %299, %v291
    %v301 = vpop.permute.xlu0 %300
    %302 = vset.pattern.permute.xlu0 0
    %303 = vperm.xlu0 %302, %v292
    %v304 = vpop.permute.xlu0 %303
    %vm305 = vcmp.eq.s32.totalorder %v283, %v295
    %vm306 = vcmp.eq.s32.totalorder %v283, %v298
    %vm307 = vcmp.eq.s32.totalorder %v283, %v301
    %vm308 = vcmp.eq.s32.totalorder %v283, %v304
    %v309 = vsel %vm305, 1, 0
    %v310 = vsel %vm306, 1, 0
    %v311 = vsel %vm307, 1, 0
    %v312 = vsel %vm308, 1, 0
    %v313 = vcvt.s32.f32 %v309
    %v314 = vcvt.s32.f32 %v310
    %v315 = vcvt.s32.f32 %v311
    %v316 = vcvt.s32.f32 %v312
    %vm317 = vcmp.ne.s32.totalorder %v289, 0
    %vm318 = vcmp.ne.s32.totalorder %v290, 0
    %vm319 = vcmp.ne.s32.totalorder %v291, 0
    %vm320 = vcmp.ne.s32.totalorder %v292, 0
    %v321 = vsel %vm317, 1, 0
    %v322 = vsel %vm318, 1, 0
    %v323 = vsel %vm319, 1, 0
    %v324 = vsel %vm320, 1, 0
    %v325 = vcvt.s32.f32 %v321
    %v326 = vcvt.s32.f32 %v322
    %v327 = vcvt.s32.f32 %v323
    %v328 = vcvt.s32.f32 %v324
    %vm329 = vcmask 7168
    %v330 = vsel %vm329, %v325, 0.0
    %v331 = vsel %vm329, %v326, 0.0
    %v332 = vadd.f32 %v330, %v331
    %v333 = vsel %vm329, %v327, 0.0
    %v334 = vadd.f32 %v332, %v333
    %v335 = vsel %vm329, %v328, 0.0
    %v336 = vadd.f32 %v334, %v335
    %337 = vadd.xlane.f32.xlu0 %v336
    %v338 = vpop.xlane.xlu0 %337
    %v339 = vrot.slane %v338, 4
    %v340 = vadd.f32 %v338, %v339
    %v341 = vrot.slane %v340, 2
    %v342 = vadd.f32 %v340, %v341
    %v343 = vrot.slane %v342, 1
    %v344 = vadd.f32 %v342, %v343
    %s345 = vtos %v344
    %s346 = smax.f32 %s345, 1.0
    %347 = vmax.xlane.f32.xlu0 %v285
    %v348 = vpop.xlane.xlu0 %347
    %349 = vmax.xlane.f32.xlu0 %v286
    %v350 = vpop.xlane.xlu0 %349
    %351 = vmax.xlane.f32.xlu0 %v287
    %v352 = vpop.xlane.xlu0 %351
    %353 = vmax.xlane.f32.xlu0 %v288
    %v354 = vpop.xlane.xlu0 %353
    %v355 = vsub.f32 %v285, %v348
    %v356 = vsub.f32 %v286, %v350
    %v357 = vsub.f32 %v287, %v352
    %v358 = vsub.f32 %v288, %v354
    %v359 = vmul.f32 %v355, 1.442695
    %v360 = vpow.pop %v359
    %v361 = vmul.f32 %v356, 1.442695
    %v362 = vpow.pop %v361
    %v363 = vmul.f32 %v357, 1.442695
    %v364 = vpow.pop %v363
    %v365 = vmul.f32 %v358, 1.442695
    %v366 = vpow.pop %v365
    %367 = vadd.xlane.f32.xlu0 %v360
    %v368 = vpop.xlane.xlu0 %367
    %369 = vadd.xlane.f32.xlu0 %v362
    %v370 = vpop.xlane.xlu0 %369
    %371 = vadd.xlane.f32.xlu0 %v364
    %v372 = vpop.xlane.xlu0 %371
    %373 = vadd.xlane.f32.xlu0 %v366
    %v374 = vpop.xlane.xlu0 %373
    %v375 = vrcp.pop %v368
    %v376 = vrcp.pop %v370
    %v377 = vrcp.pop %v372
    %v378 = vrcp.pop %v374
    %v379 = vmul.f32 %v360, %v375
    %v380 = vmul.f32 %v362, %v376
    %v381 = vmul.f32 %v364, %v377
    %v382 = vmul.f32 %v366, %v378
    %v383 = vsub.f32 %v379, %v313
    %v384 = vsub.f32 %v380, %v314
    %v385 = vsub.f32 %v381, %v315
    %v386 = vsub.f32 %v382, %v316
    %v387 = vstv %s346
    %v388 = vrcp.pop %v387
    %s389 = vtos %v388
    %v390 = vstv %s389
    %v391 = vmul.f32 %v325, %v390
    %v392 = vmul.f32 %v326, %v390
    %v393 = vmul.f32 %v327, %v390
    %v394 = vmul.f32 %v328, %v390
    %396 = vset.pattern.permute.xlu0 0
    %397 = vperm.xlu0 %396, %v391
    %v398 = vpop.permute.xlu0 %397
    %401 = vset.pattern.permute.xlu0 0
    %402 = vperm.xlu0 %401, %v392
    %v403 = vpop.permute.xlu0 %402
    %406 = vset.pattern.permute.xlu0 0
    %407 = vperm.xlu0 %406, %v393
    %v408 = vpop.permute.xlu0 %407
    %411 = vset.pattern.permute.xlu0 0
    %412 = vperm.xlu0 %411, %v394
    %v413 = vpop.permute.xlu0 %412
    %v415 = vmul.f32 %v383, %v398
    %v416 = vmul.f32 %v384, %v403
    %v417 = vmul.f32 %v385, %v408
    %v418 = vmul.f32 %v386, %v413
    %419 = vxpose.xlu0.b32.start [1/16] %v187, 128
    %420 = vxpose.xlu0.b32.cont [2/16] %v188, 128
    %421 = vxpose.xlu0.b32.cont [3/16] %v189, 128
    %422 = vxpose.xlu0.b32.cont [4/16] %v190, 128
    %423 = vxpose.xlu0.b32.cont [5/16] 0.0, 128
    %424 = vxpose.xlu0.b32.cont [6/16] 0.0, 128
    %425 = vxpose.xlu0.b32.cont [7/16] 0.0, 128
    %426 = vxpose.xlu0.b32.cont [8/16] 0.0, 128
    %427 = vxpose.xlu0.b32.cont [9/16] 0.0, 128
    %428 = vxpose.xlu0.b32.cont [10/16] 0.0, 128
    %429 = vxpose.xlu0.b32.cont [11/16] 0.0, 128
    %430 = vxpose.xlu0.b32.cont [12/16] 0.0, 128
    %431 = vxpose.xlu0.b32.cont [13/16] 0.0, 128
    %432 = vxpose.xlu0.b32.cont [14/16] 0.0, 128
    %433 = vxpose.xlu0.b32.cont [15/16] 0.0, 128
    %434 = vxpose.xlu0.b32.end [16/16] 0.0, 128
    %v435 = vpop.trf.xlu0
    %v436 = vpop.trf.xlu0
    %v437 = vpop.trf.xlu0
    %v438 = vpop.trf.xlu0
    %v439 = vpop.trf.xlu0
    %v440 = vpop.trf.xlu0
    %v441 = vpop.trf.xlu0
    %v442 = vpop.trf.xlu0
    %v443 = vpop.trf.xlu0
    %v444 = vpop.trf.xlu0
    %v445 = vpop.trf.xlu0
    %v446 = vpop.trf.xlu0
    %v447 = vpop.trf.xlu0
    %v448 = vpop.trf.xlu0
    %v449 = vpop.trf.xlu0
    %v450 = vpop.trf.xlu0
    %vm451 = vcmask 261120
    %v453 = vsel %vm451, %v435, 0
    %v456 = vsel %vm451, %v436, 0
    %v459 = vsel %vm451, %v437, 0
    %v462 = vsel %vm451, %v438, 0
    %v465 = vsel %vm451, %v439, 0
    %v468 = vsel %vm451, %v440, 0
    %v471 = vsel %vm451, %v441, 0
    %v474 = vsel %vm451, %v442, 0
    %v477 = vsel %vm451, %v443, 0
    %v480 = vsel %vm451, %v444, 0
    %v483 = vsel %vm451, %v445, 0
    %v486 = vsel %vm451, %v446, 0
    %v489 = vsel %vm451, %v447, 0
    %v492 = vsel %vm451, %v448, 0
    %v495 = vsel %vm451, %v449, 0
    %v498 = vsel %vm451, %v450, 0
    %500 = vmatprep.subr.mxu0 0.0
    %501 = vmatpush1.msra.mxu0 %v415
    %502 = vmatprep.subr.mxu0 0.0
    %503 = vmatpush1.msra.mxu0 %v416
    %504 = vmatprep.subr.mxu0 0.0
    %505 = vmatpush1.msra.mxu0 %v417
    %506 = vmatprep.subr.mxu0 0.0
    %507 = vmatpush1.msra.mxu0 %v418
    %508 = vmatprep.subr.mxu0 0.0
    %509 = vmatpush1.msra.mxu0 0.0
    %510 = vmatprep.subr.mxu0 0.0
    %511 = vmatpush1.msra.mxu0 0.0
    %512 = vmatprep.subr.mxu0 0.0
    %513 = vmatpush1.msra.mxu0 0.0
    %514 = vmatprep.subr.mxu0 0.0
    %515 = vmatpush1.msra.mxu0 0.0
    %516 = vmatprep.subr.mxu0 0.0
    %517 = vmatpush1.msra.mxu0 0.0
    %518 = vmatprep.subr.mxu0 0.0
    %519 = vmatpush1.msra.mxu0 0.0
    %520 = vmatprep.subr.mxu0 0.0
    %521 = vmatpush1.msra.mxu0 0.0
    %522 = vmatprep.subr.mxu0 0.0
    %523 = vmatpush1.msra.mxu0 0.0
    %524 = vmatprep.subr.mxu0 0.0
    %525 = vmatpush1.msra.mxu0 0.0
    %526 = vmatprep.subr.mxu0 0.0
    %527 = vmatpush1.msra.mxu0 0.0
    %528 = vmatprep.subr.mxu0 0.0
    %529 = vmatpush1.msra.mxu0 0.0
    %530 = vmatprep.subr.mxu0 0.0
    %531 = vmatpush1.msra.mxu0 0.0
    %532 = vmatprep.subr.mxu0 0.0
    %533 = vmatpush1.msra.mxu0 0.0
    %534 = vmatprep.subr.mxu0 0.0
    %535 = vmatpush1.msra.mxu0 0.0
    %536 = vmatprep.subr.mxu0 0.0
    %537 = vmatpush1.msra.mxu0 0.0
    %538 = vmatprep.subr.mxu0 0.0
    %539 = vmatpush1.msra.mxu0 0.0
    %540 = vmatprep.subr.mxu0 0.0
    %541 = vmatpush1.msra.mxu0 0.0
    %542 = vmatprep.subr.mxu0 0.0
    %543 = vmatpush1.msra.mxu0 0.0
    %544 = vmatprep.subr.mxu0 0.0
    %545 = vmatpush1.msra.mxu0 0.0
    %546 = vmatprep.subr.mxu0 0.0
    %547 = vmatpush1.msra.mxu0 0.0
    %548 = vmatprep.subr.mxu0 0.0
    %549 = vmatpush1.msra.mxu0 0.0
    %550 = vmatprep.subr.mxu0 0.0
    %551 = vmatpush1.msra.mxu0 0.0
    %552 = vmatprep.subr.mxu0 0.0
    %553 = vmatpush1.msra.mxu0 0.0
    %554 = vmatprep.subr.mxu0 0.0
    %555 = vmatpush1.msra.mxu0 0.0
    %556 = vmatprep.subr.mxu0 0.0
    %557 = vmatpush1.msra.mxu0 0.0
    %558 = vmatprep.subr.mxu0 0.0
    %559 = vmatpush1.msra.mxu0 0.0
    %560 = vmatprep.subr.mxu0 0.0
    %561 = vmatpush1.msra.mxu0 0.0
    %562 = vmatprep.subr.mxu0 0.0
    %563 = vmatpush1.msra.mxu0 0.0
    %564 = vmatprep.mubr.f32.mxu0 0.0
    %565 = vmatmul.mubr.f32.gmra.mrb[0].mxu0 %v453
    %v566 = vpop.f32.mrb[0].mxu0
    %v567 = vadd.f32 0.0, %v566
    %v568 = vpop.f32.mrb[0].mxu0
    %569 = vmatprep.mubr.f32.mxu0 0.0
    %570 = vmatmul.mubr.f32.gmra.mrb[0].mxu0 %v456
    %v571 = vpop.f32.mrb[0].mxu0
    %v572 = vadd.f32 0.0, %v571
    %v573 = vpop.f32.mrb[0].mxu0
    %574 = vmatprep.mubr.f32.mxu0 0.0
    %575 = vmatmul.mubr.f32.gmra.mrb[0].mxu0 %v459
    %v576 = vpop.f32.mrb[0].mxu0
    %v577 = vadd.f32 0.0, %v576
    %v578 = vpop.f32.mrb[0].mxu0
    %579 = vmatprep.mubr.f32.mxu0 0.0
    %580 = vmatmul.mubr.f32.gmra.mrb[0].mxu0 %v462
    %v581 = vpop.f32.mrb[0].mxu0
    %v582 = vadd.f32 0.0, %v581
    %v583 = vpop.f32.mrb[0].mxu0
    %584 = vmatprep.mubr.f32.mxu0 0.0
    %585 = vmatmul.mubr.f32.gmra.mrb[0].mxu0 %v465
    %v586 = vpop.f32.mrb[0].mxu0
    %v587 = vadd.f32 0.0, %v586
    %v588 = vpop.f32.mrb[0].mxu0
    %589 = vmatprep.mubr.f32.mxu0 0.0
    %590 = vmatmul.mubr.f32.gmra.mrb[0].mxu0 %v468
    %v591 = vpop.f32.mrb[0].mxu0
    %v592 = vadd.f32 0.0, %v591
    %v593 = vpop.f32.mrb[0].mxu0
    %594 = vmatprep.mubr.f32.mxu0 0.0
    %595 = vmatmul.mubr.f32.gmra.mrb[0].mxu0 %v471
    %v596 = vpop.f32.mrb[0].mxu0
    %v597 = vadd.f32 0.0, %v596
    %v598 = vpop.f32.mrb[0].mxu0
    %599 = vmatprep.mubr.f32.mxu0 0.0
    %600 = vmatmul.mubr.f32.gmra.mrb[0].mxu0 %v474
    %v601 = vpop.f32.mrb[0].mxu0
    %v602 = vadd.f32 0.0, %v601
    %v603 = vpop.f32.mrb[0].mxu0
    %604 = vmatprep.mubr.f32.mxu0 0.0
    %605 = vmatmul.mubr.f32.gmra.mrb[0].mxu0 %v477
    %v606 = vpop.f32.mrb[0].mxu0
    %v607 = vadd.f32 0.0, %v606
    %v608 = vpop.f32.mrb[0].mxu0
    %609 = vmatprep.mubr.f32.mxu0 0.0
    %610 = vmatmul.mubr.f32.gmra.mrb[0].mxu0 %v480
    %v611 = vpop.f32.mrb[0].mxu0
    %v612 = vadd.f32 0.0, %v611
    %v613 = vpop.f32.mrb[0].mxu0
    %614 = vmatprep.mubr.f32.mxu0 0.0
    %615 = vmatmul.mubr.f32.gmra.mrb[0].mxu0 %v483
    %v616 = vpop.f32.mrb[0].mxu0
    %v617 = vadd.f32 0.0, %v616
    %v618 = vpop.f32.mrb[0].mxu0
    %619 = vmatprep.mubr.f32.mxu0 0.0
    %620 = vmatmul.mubr.f32.gmra.mrb[0].mxu0 %v486
    %v621 = vpop.f32.mrb[0].mxu0
    %v622 = vadd.f32 0.0, %v621
    %v623 = vpop.f32.mrb[0].mxu0
    %624 = vmatprep.mubr.f32.mxu0 0.0
    %625 = vmatmul.mubr.f32.gmra.mrb[0].mxu0 %v489
    %v626 = vpop.f32.mrb[0].mxu0
    %v627 = vadd.f32 0.0, %v626
    %v628 = vpop.f32.mrb[0].mxu0
    %629 = vmatprep.mubr.f32.mxu0 0.0
    %630 = vmatmul.mubr.f32.gmra.mrb[0].mxu0 %v492
    %v631 = vpop.f32.mrb[0].mxu0
    %v632 = vadd.f32 0.0, %v631
    %v633 = vpop.f32.mrb[0].mxu0
    %634 = vmatprep.mubr.f32.mxu0 0.0
    %635 = vmatmul.mubr.f32.gmra.mrb[0].mxu0 %v495
    %v636 = vpop.f32.mrb[0].mxu0
    %v637 = vadd.f32 0.0, %v636
    %v638 = vpop.f32.mrb[0].mxu0
    %639 = vmatprep.mubr.f32.mxu0 0.0
    %640 = vmatmul.mubr.f32.gmra.mrb[0].mxu0 %v498
    %v641 = vpop.f32.mrb[0].mxu0
    %v642 = vadd.f32 0.0, %v641
    %v643 = vpop.f32.mrb[0].mxu0
    %644 = vdwg.mxu0
    %v645 = vadd.f32 %v415, %v416
    %v646 = vadd.f32 %v645, %v417
    %v647 = vadd.f32 %v646, %v418
    %v648 = vrot.slane %v647, 4
    %v649 = vadd.f32 %v647, %v648
    %v650 = vrot.slane %v649, 2
    %v651 = vadd.f32 %v649, %v650
    %v652 = vrot.slane %v651, 1
    %v653 = vadd.f32 %v651, %v652
    %654 = vmatprep.subr.mxu0 0.0
    %655 = vmatpush1.xpose.msra.mxu0 %v79
    %656 = vmatprep.subr.mxu0 0.0
    %657 = vmatpush1.xpose.msra.mxu0 %v80
    %658 = vmatprep.subr.mxu0 0.0
    %659 = vmatpush1.xpose.msra.mxu0 %v81
    %660 = vmatprep.subr.mxu0 0.0
    %661 = vmatpush1.xpose.msra.mxu0 %v82
    %662 = vmatprep.subr.mxu0 0.0
    %663 = vmatpush1.xpose.msra.mxu0 %v83
    %664 = vmatprep.subr.mxu0 0.0
    %665 = vmatpush1.xpose.msra.mxu0 %v84
    %666 = vmatprep.subr.mxu0 0.0
    %667 = vmatpush1.xpose.msra.mxu0 %v85
    %668 = vmatprep.subr.mxu0 0.0
    %669 = vmatpush1.xpose.msra.mxu0 %v86
    %670 = vmatprep.subr.mxu0 0.0
    %671 = vmatpush1.xpose.msra.mxu0 %v87
    %672 = vmatprep.subr.mxu0 0.0
    %673 = vmatpush1.xpose.msra.mxu0 %v88
    %674 = vmatprep.subr.mxu0 0.0
    %675 = vmatpush1.xpose.msra.mxu0 %v89
    %676 = vmatprep.subr.mxu0 0.0
    %677 = vmatpush1.xpose.msra.mxu0 %v90
    %678 = vmatprep.subr.mxu0 0.0
    %679 = vmatpush1.xpose.msra.mxu0 %v91
    %680 = vmatprep.subr.mxu0 0.0
    %681 = vmatpush1.xpose.msra.mxu0 %v92
    %682 = vmatprep.subr.mxu0 0.0
    %683 = vmatpush1.xpose.msra.mxu0 %v93
    %684 = vmatprep.subr.mxu0 0.0
    %685 = vmatpush1.xpose.msra.mxu0 %v94
    %686 = vmatprep.subr.mxu0 0.0
    %687 = vmatpush1.xpose.msra.mxu0 0.0
    %688 = vmatprep.subr.mxu0 0.0
    %689 = vmatpush1.xpose.msra.mxu0 0.0
    %690 = vmatprep.subr.mxu0 0.0
    %691 = vmatpush1.xpose.msra.mxu0 0.0
    %692 = vmatprep.subr.mxu0 0.0
    %693 = vmatpush1.xpose.msra.mxu0 0.0
    %694 = vmatprep.subr.mxu0 0.0
    %695 = vmatpush1.xpose.msra.mxu0 0.0
    %696 = vmatprep.subr.mxu0 0.0
    %697 = vmatpush1.xpose.msra.mxu0 0.0
    %698 = vmatprep.subr.mxu0 0.0
    %699 = vmatpush1.xpose.msra.mxu0 0.0
    %700 = vmatprep.subr.mxu0 0.0
    %701 = vmatpush1.xpose.msra.mxu0 0.0
    %702 = vmatprep.subr.mxu0 0.0
    %703 = vmatpush1.xpose.msra.mxu0 0.0
    %704 = vmatprep.subr.mxu0 0.0
    %705 = vmatpush1.xpose.msra.mxu0 0.0
    %706 = vmatprep.subr.mxu0 0.0
    %707 = vmatpush1.xpose.msra.mxu0 0.0
    %708 = vmatprep.subr.mxu0 0.0
    %709 = vmatpush1.xpose.msra.mxu0 0.0
    %710 = vmatprep.subr.mxu0 0.0
    %711 = vmatpush1.xpose.msra.mxu0 0.0
    %712 = vmatprep.subr.mxu0 0.0
    %713 = vmatpush1.xpose.msra.mxu0 0.0
    %714 = vmatprep.subr.mxu0 0.0
    %715 = vmatpush1.xpose.msra.mxu0 0.0
    %716 = vmatprep.subr.mxu0 0.0
    %717 = vmatpush1.xpose.msra.mxu0 0.0
    %718 = vmatprep.mubr.f32.mxu0 0.0
    %719 = vmatmul.mubr.f32.gmra.mrb[0].mxu0 %v415
    %v720 = vpop.f32.mrb[0].mxu0
    %v721 = vadd.f32 0.0, %v720
    %v722 = vpop.f32.mrb[0].mxu0
    %723 = vmatprep.mubr.f32.mxu0 0.0
    %724 = vmatmul.mubr.f32.gmra.mrb[0].mxu0 %v416
    %v725 = vpop.f32.mrb[0].mxu0
    %v726 = vadd.f32 0.0, %v725
    %v727 = vpop.f32.mrb[0].mxu0
    %728 = vmatprep.mubr.f32.mxu0 0.0
    %729 = vmatmul.mubr.f32.gmra.mrb[0].mxu0 %v417
    %v730 = vpop.f32.mrb[0].mxu0
    %v731 = vadd.f32 0.0, %v730
    %v732 = vpop.f32.mrb[0].mxu0
    %733 = vmatprep.mubr.f32.mxu0 0.0
    %734 = vmatmul.mubr.f32.gmra.mrb[0].mxu0 %v418
    %v735 = vpop.f32.mrb[0].mxu0
    %v736 = vadd.f32 0.0, %v735
    %v737 = vpop.f32.mrb[0].mxu0
    %738 = vdwg.mxu0
    %vm739 = vcmp.gt.f32.partialorder %v169, 0.0
    %vm740 = vcmp.gt.f32.partialorder %v174, 0.0
    %vm741 = vcmp.gt.f32.partialorder %v179, 0.0
    %vm742 = vcmp.gt.f32.partialorder %v184, 0.0
    %v743 = vsel %vm739, 1, 0
    %v744 = vsel %vm740, 1, 0
    %v745 = vsel %vm741, 1, 0
    %v746 = vsel %vm742, 1, 0
    %v747 = vcvt.s32.f32 %v743
    %v748 = vcvt.s32.f32 %v744
    %v749 = vcvt.s32.f32 %v745
    %v750 = vcvt.s32.f32 %v746
    %v751 = vmul.f32 %v721, %v747
    %v752 = vmul.f32 %v726, %v748
    %v753 = vmul.f32 %v731, %v749
    %v754 = vmul.f32 %v736, %v750
    %755 = vxpose.xlu0.b32.start [1/16] %v58, 128
    %756 = vxpose.xlu0.b32.cont [2/16] %v59, 128
    %757 = vxpose.xlu0.b32.cont [3/16] %v60, 128
    %758 = vxpose.xlu0.b32.cont [4/16] %v61, 128
    %759 = vxpose.xlu0.b32.cont [5/16] 0.0, 128
    %760 = vxpose.xlu0.b32.cont [6/16] 0.0, 128
    %761 = vxpose.xlu0.b32.cont [7/16] 0.0, 128
    %762 = vxpose.xlu0.b32.cont [8/16] 0.0, 128
    %763 = vxpose.xlu0.b32.cont [9/16] 0.0, 128
    %764 = vxpose.xlu0.b32.cont [10/16] 0.0, 128
    %765 = vxpose.xlu0.b32.cont [11/16] 0.0, 128
    %766 = vxpose.xlu0.b32.cont [12/16] 0.0, 128
    %767 = vxpose.xlu0.b32.cont [13/16] 0.0, 128
    %768 = vxpose.xlu0.b32.cont [14/16] 0.0, 128
    %769 = vxpose.xlu0.b32.cont [15/16] 0.0, 128
    %770 = vxpose.xlu0.b32.end [16/16] 0.0, 128
    %v771 = vpop.trf.xlu0
    %v772 = vpop.trf.xlu0
    %v773 = vpop.trf.xlu0
    %v774 = vpop.trf.xlu0
    %v775 = vpop.trf.xlu0
    %v776 = vpop.trf.xlu0
    %v777 = vpop.trf.xlu0
    %v778 = vpop.trf.xlu0
    %v779 = vpop.trf.xlu0
    %v780 = vpop.trf.xlu0
    %v781 = vpop.trf.xlu0
    %v782 = vpop.trf.xlu0
    %v783 = vpop.trf.xlu0
    %v784 = vpop.trf.xlu0
    %v785 = vpop.trf.xlu0
    %v786 = vpop.trf.xlu0
    %v788 = vsel %vm451, %v771, 0
    %v791 = vsel %vm451, %v772, 0
    %v794 = vsel %vm451, %v773, 0
    %v797 = vsel %vm451, %v774, 0
    %v800 = vsel %vm451, %v775, 0
    %v803 = vsel %vm451, %v776, 0
    %v806 = vsel %vm451, %v777, 0
    %v809 = vsel %vm451, %v778, 0
    %v812 = vsel %vm451, %v779, 0
    %v815 = vsel %vm451, %v780, 0
    %v818 = vsel %vm451, %v781, 0
    %v821 = vsel %vm451, %v782, 0
    %v824 = vsel %vm451, %v783, 0
    %v827 = vsel %vm451, %v784, 0
    %v830 = vsel %vm451, %v785, 0
    %v833 = vsel %vm451, %v786, 0
    %835 = vmatprep.subr.mxu0 0.0
    %836 = vmatpush1.msra.mxu0 %v751
    %837 = vmatprep.subr.mxu0 0.0
    %838 = vmatpush1.msra.mxu0 %v752
    %839 = vmatprep.subr.mxu0 0.0
    %840 = vmatpush1.msra.mxu0 %v753
    %841 = vmatprep.subr.mxu0 0.0
    %842 = vmatpush1.msra.mxu0 %v754
    %843 = vmatprep.subr.mxu0 0.0
    %844 = vmatpush1.msra.mxu0 0.0
    %845 = vmatprep.subr.mxu0 0.0
    %846 = vmatpush1.msra.mxu0 0.0
    %847 = vmatprep.subr.mxu0 0.0
    %848 = vmatpush1.msra.mxu0 0.0
    %849 = vmatprep.subr.mxu0 0.0
    %850 = vmatpush1.msra.mxu0 0.0
    %851 = vmatprep.subr.mxu0 0.0
    %852 = vmatpush1.msra.mxu0 0.0
    %853 = vmatprep.subr.mxu0 0.0
    %854 = vmatpush1.msra.mxu0 0.0
    %855 = vmatprep.subr.mxu0 0.0
    %856 = vmatpush1.msra.mxu0 0.0
    %857 = vmatprep.subr.mxu0 0.0
    %858 = vmatpush1.msra.mxu0 0.0
    %859 = vmatprep.subr.mxu0 0.0
    %860 = vmatpush1.msra.mxu0 0.0
    %861 = vmatprep.subr.mxu0 0.0
    %862 = vmatpush1.msra.mxu0 0.0
    %863 = vmatprep.subr.mxu0 0.0
    %864 = vmatpush1.msra.mxu0 0.0
    %865 = vmatprep.subr.mxu0 0.0
    %866 = vmatpush1.msra.mxu0 0.0
    %867 = vmatprep.subr.mxu0 0.0
    %868 = vmatpush1.msra.mxu0 0.0
    %869 = vmatprep.subr.mxu0 0.0
    %870 = vmatpush1.msra.mxu0 0.0
    %871 = vmatprep.subr.mxu0 0.0
    %872 = vmatpush1.msra.mxu0 0.0
    %873 = vmatprep.subr.mxu0 0.0
    %874 = vmatpush1.msra.mxu0 0.0
    %875 = vmatprep.subr.mxu0 0.0
    %876 = vmatpush1.msra.mxu0 0.0
    %877 = vmatprep.subr.mxu0 0.0
    %878 = vmatpush1.msra.mxu0 0.0
    %879 = vmatprep.subr.mxu0 0.0
    %880 = vmatpush1.msra.mxu0 0.0
    %881 = vmatprep.subr.mxu0 0.0
    %882 = vmatpush1.msra.mxu0 0.0
    %883 = vmatprep.subr.mxu0 0.0
    %884 = vmatpush1.msra.mxu0 0.0
    %885 = vmatprep.subr.mxu0 0.0
    %886 = vmatpush1.msra.mxu0 0.0
    %887 = vmatprep.subr.mxu0 0.0
    %888 = vmatpush1.msra.mxu0 0.0
    %889 = vmatprep.subr.mxu0 0.0
    %890 = vmatpush1.msra.mxu0 0.0
    %891 = vmatprep.subr.mxu0 0.0
    %892 = vmatpush1.msra.mxu0 0.0
    %893 = vmatprep.subr.mxu0 0.0
    %894 = vmatpush1.msra.mxu0 0.0
    %895 = vmatprep.subr.mxu0 0.0
    %896 = vmatpush1.msra.mxu0 0.0
    %897 = vmatprep.subr.mxu0 0.0
    %898 = vmatpush1.msra.mxu0 0.0
    %899 = vmatprep.mubr.f32.mxu0 0.0
    %900 = vmatmul.mubr.f32.gmra.mrb[0].mxu0 %v788
    %v901 = vpop.f32.mrb[0].mxu0
    %v902 = vadd.f32 0.0, %v901
    %v903 = vpop.f32.mrb[0].mxu0
    %904 = vmatprep.mubr.f32.mxu0 0.0
    %905 = vmatmul.mubr.f32.gmra.mrb[0].mxu0 %v791
    %v906 = vpop.f32.mrb[0].mxu0
    %v907 = vadd.f32 0.0, %v906
    %v908 = vpop.f32.mrb[0].mxu0
    %909 = vmatprep.mubr.f32.mxu0 0.0
    %910 = vmatmul.mubr.f32.gmra.mrb[0].mxu0 %v794
    %v911 = vpop.f32.mrb[0].mxu0
    %v912 = vadd.f32 0.0, %v911
    %v913 = vpop.f32.mrb[0].mxu0
    %914 = vmatprep.mubr.f32.mxu0 0.0
    %915 = vmatmul.mubr.f32.gmra.mrb[0].mxu0 %v797
    %v916 = vpop.f32.mrb[0].mxu0
    %v917 = vadd.f32 0.0, %v916
    %v918 = vpop.f32.mrb[0].mxu0
    %919 = vmatprep.mubr.f32.mxu0 0.0
    %920 = vmatmul.mubr.f32.gmra.mrb[0].mxu0 %v800
    %v921 = vpop.f32.mrb[0].mxu0
    %v922 = vadd.f32 0.0, %v921
    %v923 = vpop.f32.mrb[0].mxu0
    %924 = vmatprep.mubr.f32.mxu0 0.0
    %925 = vmatmul.mubr.f32.gmra.mrb[0].mxu0 %v803
    %v926 = vpop.f32.mrb[0].mxu0
    %v927 = vadd.f32 0.0, %v926
    %v928 = vpop.f32.mrb[0].mxu0
    %929 = vmatprep.mubr.f32.mxu0 0.0
    %930 = vmatmul.mubr.f32.gmra.mrb[0].mxu0 %v806
    %v931 = vpop.f32.mrb[0].mxu0
    %v932 = vadd.f32 0.0, %v931
    %v933 = vpop.f32.mrb[0].mxu0
    %934 = vmatprep.mubr.f32.mxu0 0.0
    %935 = vmatmul.mubr.f32.gmra.mrb[0].mxu0 %v809
    %v936 = vpop.f32.mrb[0].mxu0
    %v937 = vadd.f32 0.0, %v936
    %v938 = vpop.f32.mrb[0].mxu0
    %939 = vmatprep.mubr.f32.mxu0 0.0
    %940 = vmatmul.mubr.f32.gmra.mrb[0].mxu0 %v812
    %v941 = vpop.f32.mrb[0].mxu0
    %v942 = vadd.f32 0.0, %v941
    %v943 = vpop.f32.mrb[0].mxu0
    %944 = vmatprep.mubr.f32.mxu0 0.0
    %945 = vmatmul.mubr.f32.gmra.mrb[0].mxu0 %v815
    %v946 = vpop.f32.mrb[0].mxu0
    %v947 = vadd.f32 0.0, %v946
    %v948 = vpop.f32.mrb[0].mxu0
    %949 = vmatprep.mubr.f32.mxu0 0.0
    %950 = vmatmul.mubr.f32.gmra.mrb[0].mxu0 %v818
    %v951 = vpop.f32.mrb[0].mxu0
    %v952 = vadd.f32 0.0, %v951
    %v953 = vpop.f32.mrb[0].mxu0
    %954 = vmatprep.mubr.f32.mxu0 0.0
    %955 = vmatmul.mubr.f32.gmra.mrb[0].mxu0 %v821
    %v956 = vpop.f32.mrb[0].mxu0
    %v957 = vadd.f32 0.0, %v956
    %v958 = vpop.f32.mrb[0].mxu0
    %959 = vmatprep.mubr.f32.mxu0 0.0
    %960 = vmatmul.mubr.f32.gmra.mrb[0].mxu0 %v824
    %v961 = vpop.f32.mrb[0].mxu0
    %v962 = vadd.f32 0.0, %v961
    %v963 = vpop.f32.mrb[0].mxu0
    %964 = vmatprep.mubr.f32.mxu0 0.0
    %965 = vmatmul.mubr.f32.gmra.mrb[0].mxu0 %v827
    %v966 = vpop.f32.mrb[0].mxu0
    %v967 = vadd.f32 0.0, %v966
    %v968 = vpop.f32.mrb[0].mxu0
    %969 = vmatprep.mubr.f32.mxu0 0.0
    %970 = vmatmul.mubr.f32.gmra.mrb[0].mxu0 %v830
    %v971 = vpop.f32.mrb[0].mxu0
    %v972 = vadd.f32 0.0, %v971
    %v973 = vpop.f32.mrb[0].mxu0
    %974 = vmatprep.mubr.f32.mxu0 0.0
    %975 = vmatmul.mubr.f32.gmra.mrb[0].mxu0 %v833
    %v976 = vpop.f32.mrb[0].mxu0
    %v977 = vadd.f32 0.0, %v976
    %v978 = vpop.f32.mrb[0].mxu0
    %979 = vdwg.mxu0
    %v980 = vadd.f32 %v751, %v752
    %v981 = vadd.f32 %v980, %v753
    %v982 = vadd.f32 %v981, %v754
    %v983 = vrot.slane %v982, 4
    %v984 = vadd.f32 %v982, %v983
    %v985 = vrot.slane %v984, 2
    %v986 = vadd.f32 %v984, %v985
    %v987 = vrot.slane %v986, 1
    %v988 = vadd.f32 %v986, %v987
    %v989 = vmul.f32 %v902, 0.001
    %v990 = vmul.f32 %v907, 0.001
    %v991 = vmul.f32 %v912, 0.001
    %v992 = vmul.f32 %v917, 0.001
    %v993 = vmul.f32 %v922, 0.001
    %v994 = vmul.f32 %v927, 0.001
    %v995 = vmul.f32 %v932, 0.001
    %v996 = vmul.f32 %v937, 0.001
    %v997 = vmul.f32 %v942, 0.001
    %v998 = vmul.f32 %v947, 0.001
    %v999 = vmul.f32 %v952, 0.001
    %v1000 = vmul.f32 %v957, 0.001
    %v1001 = vmul.f32 %v962, 0.001
    %v1002 = vmul.f32 %v967, 0.001
    %v1003 = vmul.f32 %v972, 0.001
    %v1004 = vmul.f32 %v977, 0.001
    %v1005 = vsub.f32 %v62, %v989
    %v1006 = vsub.f32 %v63, %v990
    %v1007 = vsub.f32 %v64, %v991
    %v1008 = vsub.f32 %v65, %v992
    %v1009 = vsub.f32 %v66, %v993
    %v1010 = vsub.f32 %v67, %v994
    %v1011 = vsub.f32 %v68, %v995
    %v1012 = vsub.f32 %v69, %v996
    %v1013 = vsub.f32 %v70, %v997
    %v1014 = vsub.f32 %v71, %v998
    %v1015 = vsub.f32 %v72, %v999
    %v1016 = vsub.f32 %v73, %v1000
    %v1017 = vsub.f32 %v74, %v1001
    %v1018 = vsub.f32 %v75, %v1002
    %v1019 = vsub.f32 %v76, %v1003
    %v1020 = vsub.f32 %v77, %v1004
    %1021 = vst [vmem:[#allocation7] sm:$0xff] %v1005
    %1022 = vst [vmem:[#allocation7 + $0x8] sm:$0xff] %v1006
    %1023 = vst [vmem:[#allocation7 + $0x10] sm:$0xff] %v1007
    %1024 = vst [vmem:[#allocation7 + $0x18] sm:$0xff] %v1008
    %1025 = vst [vmem:[#allocation7 + $0x20] sm:$0xff] %v1009
    %1026 = vst [vmem:[#allocation7 + $0x28] sm:$0xff] %v1010
    %1027 = vst [vmem:[#allocation7 + $0x30] sm:$0xff] %v1011
    %1028 = vst [vmem:[#allocation7 + $0x38] sm:$0xff] %v1012
    %1029 = vst [vmem:[#allocation7 + $0x40] sm:$0xff] %v1013
    %1030 = vst [vmem:[#allocation7 + $0x48] sm:$0xff] %v1014
    %1031 = vst [vmem:[#allocation7 + $0x50] sm:$0xff] %v1015
    %1032 = vst [vmem:[#allocation7 + $0x58] sm:$0xff] %v1016
    %1033 = vst [vmem:[#allocation7 + $0x60] sm:$0xff] %v1017
    %1034 = vst [vmem:[#allocation7 + $0x68] sm:$0xff] %v1018
    %1035 = vst [vmem:[#allocation7 + $0x70] sm:$0xff] %v1019
    %1036 = vst [vmem:[#allocation7 + $0x78] sm:$0xff] %v1020
    %v1037 = vmul.f32 %v988, 0.001
    %v1038 = vsub.f32 %v78, %v1037
    %1039 = vst [vmem:[#allocation8] sm:$0x1] %v1038
    %v1040 = vmul.f32 %v567, 0.001
    %v1041 = vmul.f32 %v572, 0.001
    %v1042 = vmul.f32 %v577, 0.001
    %v1043 = vmul.f32 %v582, 0.001
    %v1044 = vmul.f32 %v587, 0.001
    %v1045 = vmul.f32 %v592, 0.001
    %v1046 = vmul.f32 %v597, 0.001
    %v1047 = vmul.f32 %v602, 0.001
    %v1048 = vmul.f32 %v607, 0.001
    %v1049 = vmul.f32 %v612, 0.001
    %v1050 = vmul.f32 %v617, 0.001
    %v1051 = vmul.f32 %v622, 0.001
    %v1052 = vmul.f32 %v627, 0.001
    %v1053 = vmul.f32 %v632, 0.001
    %v1054 = vmul.f32 %v637, 0.001
    %v1055 = vmul.f32 %v642, 0.001
    %v1056 = vsub.f32 %v79, %v1040
    %v1057 = vsub.f32 %v80, %v1041
    %v1058 = vsub.f32 %v81, %v1042
    %v1059 = vsub.f32 %v82, %v1043
    %v1060 = vsub.f32 %v83, %v1044
    %v1061 = vsub.f32 %v84, %v1045
    %v1062 = vsub.f32 %v85, %v1046
    %v1063 = vsub.f32 %v86, %v1047
    %v1064 = vsub.f32 %v87, %v1048
    %v1065 = vsub.f32 %v88, %v1049
    %v1066 = vsub.f32 %v89, %v1050
    %v1067 = vsub.f32 %v90, %v1051
    %v1068 = vsub.f32 %v91, %v1052
    %v1069 = vsub.f32 %v92, %v1053
    %v1070 = vsub.f32 %v93, %v1054
    %v1071 = vsub.f32 %v94, %v1055
    %1072 = vst [vmem:[#allocation10] sm:$0xff] %v1056
    %1073 = vst [vmem:[#allocation10 + $0x8] sm:$0xff] %v1057
    %1074 = vst [vmem:[#allocation10 + $0x10] sm:$0xff] %v1058
    %1075 = vst [vmem:[#allocation10 + $0x18] sm:$0xff] %v1059
    %1076 = vst [vmem:[#allocation10 + $0x20] sm:$0xff] %v1060
    %1077 = vst [vmem:[#allocation10 + $0x28] sm:$0xff] %v1061
    %1078 = vst [vmem:[#allocation10 + $0x30] sm:$0xff] %v1062
    %1079 = vst [vmem:[#allocation10 + $0x38] sm:$0xff] %v1063
    %1080 = vst [vmem:[#allocation10 + $0x40] sm:$0xff] %v1064
    %1081 = vst [vmem:[#allocation10 + $0x48] sm:$0xff] %v1065
    %1082 = vst [vmem:[#allocation10 + $0x50] sm:$0xff] %v1066
    %1083 = vst [vmem:[#allocation10 + $0x58] sm:$0xff] %v1067
    %1084 = vst [vmem:[#allocation10 + $0x60] sm:$0xff] %v1068
    %1085 = vst [vmem:[#allocation10 + $0x68] sm:$0xff] %v1069
    %1086 = vst [vmem:[#allocation10 + $0x70] sm:$0xff] %v1070
    %1087 = vst [vmem:[#allocation10 + $0x78] sm:$0xff] %v1071
    %v1088 = vmul.f32 %v653, 0.001
    %v1089 = vsub.f32 %v95, %v1088
    %1090 = vst [vmem:[#allocation11] sm:$0x1] %v1089
    // Predicated region
    $region34: #{tpu_custom_call.1} parent=1 // pred_check
      _
    $region35: #{tpu_custom_call.1} parent=1 // pred_check_branch
      %1092 = sbr.rel (0) target = $region37
    $region36: #{tpu_custom_call.1} parent=1 // pred_region
      %s1094 = ssub.s32 2048, 2048
      %1095 = vsyncadd [#allocation4], %s1094
      %s1096 = sshll.u32 [#allocation7], 4
      %s1097 = int_to_ptr.vmem [resolvable:$true] %s1096
      %1102 = dma.vmem_to_hbm [thread:$0]  %s1097, 2048, %s6, [#allocation4], 128, 128, 8
    $region37: #{tpu_custom_call.1} parent=1 // pred_fallthru
      _
    // Predicated region
    $region38: #{tpu_custom_call.1} parent=1 // pred_check
      _
    $region39: #{tpu_custom_call.1} parent=1 // pred_check_branch
      %1104 = sbr.rel (0) target = $region41
    $region40: #{tpu_custom_call.1} parent=1 // pred_region
      %s1106 = ssub.s32 16, 16
      %1107 = vsyncadd [#allocation9], %s1106
      %s1109 = sshll.u32 [#allocation8], 4
      %s1110 = int_to_ptr.vmem [resolvable:$true] %s1109
      %1112 = dma.vmem_to_hbm [thread:$0]  %s1110, 16, %s7, [#allocation9]
    $region41: #{tpu_custom_call.1} parent=1 // pred_fallthru
      _
    // Predicated region
    $region42: #{tpu_custom_call.1} parent=1 // pred_check
      _
    $region43: #{tpu_custom_call.1} parent=1 // pred_check_branch
      %1114 = sbr.rel (0) target = $region45
    $region44: #{tpu_custom_call.1} parent=1 // pred_region
      %s1116 = ssub.s32 2048, 2048
      %1117 = vsyncadd [#allocation9], %s1116
      %s1118 = sshll.u32 [#allocation10], 4
      %s1119 = int_to_ptr.vmem [resolvable:$true] %s1118
      %1124 = dma.vmem_to_hbm [thread:$0]  %s1119, 2048, %s8, [#allocation9], 128, 128, 8
    $region45: #{tpu_custom_call.1} parent=1 // pred_fallthru
      _
    // Predicated region
    $region46: #{tpu_custom_call.1} parent=1 // pred_check
      _
    $region47: #{tpu_custom_call.1} parent=1 // pred_check_branch
      %1126 = sbr.rel (0) target = $region49
    $region48: #{tpu_custom_call.1} parent=1 // pred_region
      %s1128 = ssub.s32 16, 16
      %1129 = vsyncadd [#allocation12], %s1128
      %s1131 = sshll.u32 [#allocation11], 4
      %s1132 = int_to_ptr.vmem [resolvable:$true] %s1131
      %1134 = dma.vmem_to_hbm [thread:$0]  %s1132, 16, %s9, [#allocation12]
    $region49: #{tpu_custom_call.1} parent=1 // pred_fallthru
      _
    // Predicated region
    $region50: #{tpu_custom_call.1} parent=1 // pred_check
      _
    $region51: #{tpu_custom_call.1} parent=1 // pred_check_branch
      %1136 = sbr.rel (0) target = $region53
    $region52: #{tpu_custom_call.1} parent=1 // pred_region
      %1137 = dma.done [#allocation4], 2048
    $region53: #{tpu_custom_call.1} parent=1 // pred_fallthru
      _
    // Predicated region
    $region54: #{tpu_custom_call.1} parent=1 // pred_check
      _
    $region55: #{tpu_custom_call.1} parent=1 // pred_check_branch
      %1139 = sbr.rel (0) target = $region57
    $region56: #{tpu_custom_call.1} parent=1 // pred_region
      %1140 = dma.done [#allocation9], 16
    $region57: #{tpu_custom_call.1} parent=1 // pred_fallthru
      _
    // Predicated region
    $region58: #{tpu_custom_call.1} parent=1 // pred_check
      _
    $region59: #{tpu_custom_call.1} parent=1 // pred_check_branch
      %1142 = sbr.rel (0) target = $region61
    $region60: #{tpu_custom_call.1} parent=1 // pred_region
      %1143 = dma.done [#allocation9], 2048
    $region61: #{tpu_custom_call.1} parent=1 // pred_fallthru
      _
    // Predicated region
    $region62: #{tpu_custom_call.1} parent=1 // pred_check
      _
    $region63: #{tpu_custom_call.1} parent=1 // pred_check_branch
      %1145 = sbr.rel (0) target = $region65
    $region64: #{tpu_custom_call.1} parent=1 // pred_region
      %1146 = dma.done [#allocation12], 16
    $region65: #{tpu_custom_call.1} parent=1 // pred_fallthru
      _
    %1147 = vsyncpa [#allocation3], 1
    %1148 = vsyncpa [#allocation6], 1
    %1149 = vsyncpa [#allocation4], 1
    %1150 = vsyncpa [#allocation9], 1
    %1151 = vsyncpa [#allocation12], 1

</llo_original>
